<compile_context>
chip_gen: v5e
topology: v5e:2x2
jax: 0.10.0
libtpu: 0.0.40
codegen_flags: <defaults>
</compile_context>

<pallas_src>
import jax
import jax.numpy as jnp
from jax.experimental import pallas as pl
from jax.experimental.pallas import tpu as pltpu


def _seq_loss_kernel(probs_ref, tok_ref, mask_ref, out_ref):
    probs = probs_ref[...]                       # (TR, V) native dtype
    tok = tok_ref[...]                           # (TR, 1) int32
    mask = mask_ref[...]                         # (TR, 1) float32
    tr, v = probs.shape

    # Gather probs[r, tok[r]] via compare/select + lane reduce.  Exactly one
    # element per row survives the select, so the sum is exact in any dtype.
    vids = jax.lax.broadcasted_iota(jnp.int32, (tr, v), 1)
    sel = jnp.where(vids == tok, probs, jnp.array(0, dtype=probs.dtype))
    gathered = jnp.sum(sel, axis=1, keepdims=True).astype(jnp.float32)  # (TR,1)

    losses = -jnp.log(gathered + jnp.float32(1e-10))                    # (TR,1)
    out_ref[...] = losses * mask                                        # (TR,1)


def sequence_loss(probs, seqs):
    """probs: (B, T, V) float (any TPU dtype), seqs: (B, T) int -> scalar f32."""
    B, T, V = probs.shape
    rows = B * T

    seqs = seqs.astype(jnp.int32)
    probs2 = probs.reshape(rows, V)              # keep native dtype in HBM
    tok = seqs.reshape(rows, 1)

    # Prefix mask (hoisted out of the kernel): len = count(seqs > 0) + 1.
    seq_len = jnp.sum((seqs > 0).astype(jnp.int32), axis=1) + 1         # (B,)
    mask = (jnp.arange(T, dtype=jnp.int32)[None, :] < seq_len[:, None])
    mask = mask.astype(jnp.float32).reshape(rows, 1)

    # Row-tile sizing: keep one probs buffer ~<=4 MiB so 2x double-buffering
    # fits every generation's default scoped VMEM (v5e 16 MiB, v6e/v7x 32 MiB).
    itemsize = jnp.dtype(probs2.dtype).itemsize
    budget_bytes = 4 * 1024 * 1024
    tile_rows = budget_bytes // max(1, V * itemsize)
    tile_rows = max(8, min(1024, (tile_rows // 8) * 8))
    rows_8 = ((rows + 7) // 8) * 8
    tile_rows = min(tile_rows, rows_8)

    padded_rows = ((rows + tile_rows - 1) // tile_rows) * tile_rows
    pad = padded_rows - rows
    if pad:
        probs2 = jnp.pad(probs2, ((0, pad), (0, 0)))
        tok = jnp.pad(tok, ((0, pad), (0, 0)))
        mask = jnp.pad(mask, ((0, pad), (0, 0)))   # padded rows -> mask 0
    num_tiles = padded_rows // tile_rows

    per_row = pl.pallas_call(
        _seq_loss_kernel,
        out_shape=jax.ShapeDtypeStruct((padded_rows, 1), jnp.float32),
        grid_spec=pltpu.PrefetchScalarGridSpec(
            num_scalar_prefetch=0,
            grid=(num_tiles,),
            in_specs=[
                pl.BlockSpec((tile_rows, V), lambda i: (i, 0)),
                pl.BlockSpec((tile_rows, 1), lambda i: (i, 0)),
                pl.BlockSpec((tile_rows, 1), lambda i: (i, 0)),
            ],
            out_specs=pl.BlockSpec((tile_rows, 1), lambda i: (i, 0)),
        ),
        compiler_params=pltpu.CompilerParams(
            dimension_semantics=("parallel",),
        ),
    )(probs2, tok, mask)

    # Tiny final reduction (per-tile/per-row partials -> scalar) in JAX.
    total = jnp.sum(per_row)
    count = jnp.sum(mask)
    return total / count


def _sequence_loss_ref(probs, seqs):
    """Pure-JAX reference mirroring the PyTorch module."""
    B, T, V = probs.shape
    seq_len = jnp.sum(seqs > 0, axis=1) + 1                      # (B,)
    tids = jnp.arange(T)[None, :]                                # (1, T)
    mask = (tids < seq_len[:, None]).astype(jnp.float32)         # (B, T)
    gathered = jnp.take_along_axis(probs, seqs[:, :, None], axis=2)[..., 0]
    losses = -jnp.log(gathered.astype(jnp.float32) + 1e-10)
    return jnp.sum(losses * mask) / jnp.sum(mask)


if __name__ == "__main__":
    key = jax.random.PRNGKey(0)
    B, T, V = 2, 8, 32

    k1, k2 = jax.random.split(key)
    logits = jax.random.normal(k1, (B, T, V), dtype=jnp.float32)
    probs = jax.nn.softmax(logits, axis=-1)
    # token ids in [0, V); zeros act as "padding" for the mask-length rule.
    seqs = jax.random.randint(k2, (B, T), 0, V, dtype=jnp.int32)

    loss = sequence_loss(probs, seqs)
    loss = jax.block_until_ready(loss)

    ref = _sequence_loss_ref(probs, seqs)
    assert jnp.allclose(loss, ref, rtol=1e-5, atol=1e-6), (loss, ref)

    print("KERNEL_OK")
</pallas_src>

<mosaic_0001>
module attributes {stable_mosaic.version = 11 : i64} {
  func.func @_seq_loss_kernel(%arg0: i32, %arg1: memref<16x32xf32, #tpu.memory_space<vmem>>, %arg2: memref<16x1xi32, #tpu.memory_space<vmem>>, %arg3: memref<16x1xf32, #tpu.memory_space<vmem>>, %arg4: memref<16x1xf32, #tpu.memory_space<vmem>>) attributes {dimension_semantics = [#tpu.dimension_semantics<parallel>], iteration_bounds = array<i64: 1>, scalar_prefetch = 0 : i64, scratch_operands = 0 : i64, tpu.core_type = #tpu.core_type<tc>, window_params = [{transform_indices = @transform_0, window_bounds = array<i64: 16, 32>}, {transform_indices = @transform_1, window_bounds = array<i64: 16, 1>}, {transform_indices = @transform_2, window_bounds = array<i64: 16, 1>}, {transform_indices = @transform_3, window_bounds = array<i64: 16, 1>}]} {
    %c0 = arith.constant 0 : index
    %c0_0 = arith.constant 0 : index
    %0 = vector.load %arg1[%c0, %c0_0] : memref<16x32xf32, #tpu.memory_space<vmem>>, vector<16x32xf32>
    %c0_1 = arith.constant 0 : index
    %c0_2 = arith.constant 0 : index
    %1 = vector.load %arg2[%c0_1, %c0_2] : memref<16x1xi32, #tpu.memory_space<vmem>>, vector<16x1xi32>
    %c0_3 = arith.constant 0 : index
    %c0_4 = arith.constant 0 : index
    %2 = vector.load %arg3[%c0_3, %c0_4] : memref<16x1xf32, #tpu.memory_space<vmem>>, vector<16x1xf32>
    %3 = tpu.iota {dimensions = array<i32: 1>} : vector<16x32xi32>
    %4 = vector.broadcast %1 : vector<16x1xi32> to vector<16x32xi32>
    %5 = arith.cmpi eq, %3, %4 : vector<16x32xi32>
    %cst = arith.constant 0.000000e+00 : f32
    %6 = vector.broadcast %cst : f32 to vector<16x32xf32>
    %7 = arith.select %5, %0, %6 : vector<16x32xi1>, vector<16x32xf32>
    %cst_5 = arith.constant dense<0.000000e+00> : vector<16xf32>
    %8 = vector.multi_reduction <add>, %7, %cst_5 [1] : vector<16x32xf32> to vector<16xf32>
    %9 = vector.shape_cast %8 : vector<16xf32> to vector<16x1xf32>
    %cst_6 = arith.constant 1.000000e-10 : f32
    %10 = vector.broadcast %cst_6 : f32 to vector<16x1xf32>
    %11 = arith.addf %9, %10 : vector<16x1xf32>
    %12 = math.log %11 : vector<16x1xf32>
    %cst_7 = arith.constant 0.000000e+00 : f32
    %13 = vector.broadcast %cst_7 : f32 to vector<16x1xf32>
    %14 = arith.subf %13, %12 : vector<16x1xf32>
    %15 = arith.mulf %14, %2 : vector<16x1xf32>
    %c0_8 = arith.constant 0 : index
    %c0_9 = arith.constant 0 : index
    %16 = vector.load %arg4[%c0_8, %c0_9] : memref<16x1xf32, #tpu.memory_space<vmem>>, vector<16x1xf32>
    tpu.vector_store %arg4[%c0_8, %c0_9], %15 {strides = array<i32>} : memref<16x1xf32, #tpu.memory_space<vmem>>, vector<16x1xf32>,
    return
  }
  func.func @transform_0(%arg0: i32) -> (i32, i32) {
    %c0_i32 = arith.constant 0 : i32
    %c0_i32_0 = arith.constant 0 : i32
    return %arg0, %c0_i32 : i32, i32
  }
  func.func @transform_1(%arg0: i32) -> (i32, i32) {
    %c0_i32 = arith.constant 0 : i32
    %c0_i32_0 = arith.constant 0 : i32
    return %arg0, %c0_i32 : i32, i32
  }
  func.func @transform_2(%arg0: i32) -> (i32, i32) {
    %c0_i32 = arith.constant 0 : i32
    %c0_i32_0 = arith.constant 0 : i32
    return %arg0, %c0_i32 : i32, i32
  }
  func.func @transform_3(%arg0: i32) -> (i32, i32) {
    %c0_i32 = arith.constant 0 : i32
    %c0_i32_0 = arith.constant 0 : i32
    return %arg0, %c0_i32 : i32, i32
  }
}

</mosaic_0001>

<llo_original>
// kernel: tpu_custom_call.1
$region0: #{tpu_custom_call.1}
  #allocation0 [shape = 'u32[]', space=smem, size = 0x4, offset = 0x4, fixed_abs, tag = 'smem constant byte address 0x4 - core index']
  #allocation1 [shape = 'u32[72,128]{1,0:T(1,128)}', space=vmem, size = 0x9000, scoped, tag = 'internal scratch']
  %s0 = inlined_call_operand.vmem [shape: f32[16,32], index: 0, kind: input, shape index: {}]
  %s1 = inlined_call_operand.vmem [shape: s32[16,1], index: 1, kind: input, shape index: {}]
  %s2 = inlined_call_operand.vmem [shape: f32[16,1], index: 2, kind: input, shape index: {}]
  %s3 = inlined_call_operand.vmem [shape: f32[16,1], index: 3, kind: output, shape index: {}]
  %s4 = sld [smem:[#allocation0]]
  $region22: #{tpu_custom_call.1} parent=0
    _
  %s6 = ssub.s32 1, %s4
  %s7 = scalar_select 0, %s6, %s4
  // Predicated region
  $region2: #{tpu_custom_call.1} parent=0 // pred_check
    _
  $region3: #{tpu_custom_call.1} parent=0 // pred_check_branch
    %9 = sbr.rel (0) target = $region5
  $region4: #{tpu_custom_call.1} parent=0 // pred_region
    _
  $region5: #{tpu_custom_call.1} parent=0 // pred_fallthru
    _
  // Predicated region
  $region6: #{tpu_custom_call.1} parent=0 // pred_check
    _
  $region7: #{tpu_custom_call.1} parent=0 // pred_check_branch
    %11 = sbr.rel (0) target = $region9
  $region8: #{tpu_custom_call.1} parent=0 // pred_region
    _
  $region9: #{tpu_custom_call.1} parent=0 // pred_fallthru
    _
  // Predicated region
  $region10: #{tpu_custom_call.1} parent=0 // pred_check
    _
  $region11: #{tpu_custom_call.1} parent=0 // pred_check_branch
    %13 = sbr.rel (0) target = $region13
  $region12: #{tpu_custom_call.1} parent=0 // pred_region
    _
  $region13: #{tpu_custom_call.1} parent=0 // pred_fallthru
    _
  %v14 = vld [vmem:[%s0] sm:$0xff]
  %v15 = vld [vmem:[%s0 + $0x8] sm:$0xff]
  %v16 = vld [vmem:[%s1] sm:$0xff]
  %v17 = vld [vmem:[%s1 + $0x8] sm:$0xff]
  %v18 = vld [vmem:[%s2] sm:$0xff]
  %v19 = vld [vmem:[%s2 + $0x8] sm:$0xff]
  %v20 = vlaneseq
  %v21 = vand.u32 %v20, 127
  %22 = vset.pattern.permute.xlu0 0
  %23 = vperm.xlu0 %22, %v16
  %v24 = vpop.permute.xlu0 %23
  %25 = vset.pattern.permute.xlu0 0
  %26 = vperm.xlu0 %25, %v17
  %v27 = vpop.permute.xlu0 %26
  %vm28 = vcmp.eq.s32.totalorder %v21, %v24
  %vm29 = vcmp.eq.s32.totalorder %v21, %v27
  %v30 = vsel %vm28, %v14, 0.0
  %v31 = vsel %vm29, %v15, 0.0
  %vm32 = vcmask 261120
  %v33 = vsel %vm32, %v30, 0.0
  %34 = vadd.xlane.f32.xlu0 %v33
  %v35 = vpop.xlane.xlu0 %34
  %v36 = vsel %vm32, %v31, 0.0
  %37 = vadd.xlane.f32.xlu0 %v36
  %v38 = vpop.xlane.xlu0 %37
  %v39 = vadd.f32 %v35, 1e-10
  %v40 = vadd.f32 %v38, 1e-10
  %v41 = vlog2.pop %v39
  %v42 = vmul.f32 %v41, 0.6931472
  %v43 = vlog2.pop %v40
  %v44 = vmul.f32 %v43, 0.6931472
  %v45 = vsub.f32 0.0, %v42
  %v46 = vsub.f32 0.0, %v44
  %v47 = vmul.f32 %v45, %v18
  %v48 = vmul.f32 %v46, %v19
  %vm49 = vcmask 7168
  %50 = vst.msk [vmem:[%s3] sm:$0xff] %vm49, %v47
  %51 = vst.msk [vmem:[%s3 + $0x8] sm:$0xff] %vm49, %v48
  // Predicated region
  $region14: #{tpu_custom_call.1} parent=0 // pred_check
    _
  $region15: #{tpu_custom_call.1} parent=0 // pred_check_branch
    %53 = sbr.rel (0) target = $region17
  $region16: #{tpu_custom_call.1} parent=0 // pred_region
    _
  $region17: #{tpu_custom_call.1} parent=0 // pred_fallthru
    _
  // Predicated region
  $region18: #{tpu_custom_call.1} parent=0 // pred_check
    _
  $region19: #{tpu_custom_call.1} parent=0 // pred_check_branch
    %55 = sbr.rel (0) target = $region21
  $region20: #{tpu_custom_call.1} parent=0 // pred_region
    _
  $region21: #{tpu_custom_call.1} parent=0 // pred_fallthru
    _

</llo_original>
